<compile_context>
chip_gen: v5e
topology: v5e:2x2
jax: 0.10.0
libtpu: 0.0.40
codegen_flags: <defaults>
</compile_context>

<pallas_src>
import functools

import jax
import jax.numpy as jnp
from jax.experimental import pallas as pl
from jax.experimental.pallas import tpu as pltpu


def linear_kernel(x_ref, w_ref, b_ref, o_ref, acc_ref):
    # x_ref: (tm, tk)   w_ref: (tn, tk)   b_ref: (1, tn) f32   o_ref: (tm, tn)
    k = pl.program_id(2)

    @pl.when(k == 0)
    def _():
        acc_ref[...] = jnp.zeros_like(acc_ref)

    # Contract the K axis of both operands (W stays in its natural (N, K)
    # layout -> no HBM transpose in the wrapper; MXU handles trans_b).
    acc_ref[...] += jax.lax.dot_general(
        x_ref[...], w_ref[...],
        dimension_numbers=(((1,), (1,)), ((), ())),
        preferred_element_type=jnp.float32)

    @pl.when(k == pl.num_programs(2) - 1)
    def _():
        o_ref[...] = (acc_ref[...] + b_ref[...]).astype(o_ref.dtype)


def _round_up(x, m):
    return ((x + m - 1) // m) * m


@functools.partial(jax.jit, static_argnames=("tm", "tn", "tk", "compute_dtype"))
def mlp_projector(x, weight, bias, *, tm=256, tn=256, tk=512,
                  compute_dtype=jnp.bfloat16):
    """x: (M, in_size); weight: (out_size, in_size); bias: (out_size,)."""
    M, K = x.shape
    N, K_w = weight.shape
    assert K == K_w, "weight in_size mismatch"
    out_dtype = x.dtype

    # Clamp tiles to the (aligned) problem size; keep sublane/lane alignment:
    # tm multiple of 16 (bf16 sublane packing), tn/tk multiples of 128 (lanes).
    tm = min(tm, _round_up(M, 16))
    tn = min(tn, _round_up(N, 128))
    tk = min(tk, _round_up(K, 128))

    Mp, Np, Kp = _round_up(M, tm), _round_up(N, tn), _round_up(K, tk)

    xc = x.astype(compute_dtype)
    wc = weight.astype(compute_dtype)           # stays (N, K): no HBM transpose
    bc = bias.astype(jnp.float32).reshape(1, N)

    # Zero-pad to tile multiples (zeros contribute nothing to the dot; padded
    # rows/cols of the output are sliced off below). Lane-dense output.
    if (Mp, Kp) != (M, K):
        xc = jnp.pad(xc, ((0, Mp - M), (0, Kp - K)))
    if (Np, Kp) != (N, K):
        wc = jnp.pad(wc, ((0, Np - N), (0, Kp - K)))
    if Np != N:
        bc = jnp.pad(bc, ((0, 0), (0, Np - N)))

    grid = (Mp // tm, Np // tn, Kp // tk)

    # VMEM budget: double-buffered x / w / bias / out tiles + f32 accumulator.
    cbytes = jnp.dtype(compute_dtype).itemsize
    obytes = jnp.dtype(out_dtype).itemsize
    tile_bytes = (2 * (tm * tk * cbytes + tn * tk * cbytes
                       + tm * tn * obytes + tn * 4)
                  + tm * tn * 4)
    vmem_limit = int(min(tile_bytes + (8 << 20), 96 << 20))

    cost = pl.CostEstimate(
        flops=2 * Mp * Np * Kp,
        transcendentals=0,
        bytes_accessed=Mp * Kp * cbytes + Np * Kp * cbytes + Mp * Np * obytes)

    out = pl.pallas_call(
        linear_kernel,
        out_shape=jax.ShapeDtypeStruct((Mp, Np), out_dtype),
        grid_spec=pltpu.PrefetchScalarGridSpec(
            num_scalar_prefetch=0,
            grid=grid,
            in_specs=[
                pl.BlockSpec((tm, tk), lambda i, j, k: (i, k)),  # x tile
                pl.BlockSpec((tn, tk), lambda i, j, k: (j, k)),  # W tile (N,K)
                pl.BlockSpec((1, tn), lambda i, j, k: (0, j)),   # bias tile
            ],
            out_specs=pl.BlockSpec((tm, tn), lambda i, j, k: (i, j)),
            scratch_shapes=[pltpu.VMEM((tm, tn), jnp.float32)],
        ),
        compiler_params=pltpu.CompilerParams(
            dimension_semantics=("parallel", "parallel", "arbitrary"),
            vmem_limit_bytes=vmem_limit),
        cost_estimate=cost,
    )(xc, wc, bc)

    if (Mp, Np) != (M, N):
        out = out[:M, :N]
    return out


if __name__ == "__main__":
    # Small shapes consistent with the module: batch=16, in_size=32, out_size=64.
    M, in_size, out_size = 16, 32, 64

    key = jax.random.PRNGKey(0)
    kx, kw, kb = jax.random.split(key, 3)

    # Deterministic synthetic parameters (PyTorch Linear-style uniform init).
    bound = 1.0 / jnp.sqrt(in_size)
    weight = jax.random.uniform(kw, (out_size, in_size), jnp.float32, -bound, bound)
    bias = jax.random.uniform(kb, (out_size,), jnp.float32, -bound, bound)
    x = jax.random.normal(kx, (M, in_size), jnp.float32)

    out = mlp_projector(x, weight, bias)
    out = jax.block_until_ready(out)

    # Pure-JAX f32 reference (kernel computes in bf16 with f32 accumulation).
    ref = x @ weight.T + bias
    assert out.shape == (M, out_size)
    assert jnp.allclose(out, ref, atol=2e-2, rtol=2e-2), "mismatch vs reference"

    print("KERNEL_OK")
</pallas_src>

<mosaic_0001>
module attributes {stable_mosaic.version = 11 : i64} {
  func.func @linear_kernel(%arg0: i32, %arg1: i32, %arg2: i32, %arg3: memref<16x128xbf16, #tpu.memory_space<vmem>>, %arg4: memref<128x128xbf16, #tpu.memory_space<vmem>>, %arg5: memref<1x128xf32, #tpu.memory_space<vmem>>, %arg6: memref<16x128xf32, #tpu.memory_space<vmem>>, %arg7: memref<16x128xf32, #tpu.memory_space<vmem>>) attributes {dimension_semantics = [#tpu.dimension_semantics<parallel>, #tpu.dimension_semantics<parallel>, #tpu.dimension_semantics<arbitrary>], iteration_bounds = array<i64: 1, 1, 1>, scalar_prefetch = 0 : i64, scratch_operands = 1 : i64, tpu.core_type = #tpu.core_type<tc>, window_params = [{transform_indices = @transform_0, window_bounds = array<i64: 16, 128>}, {transform_indices = @transform_1, window_bounds = array<i64: 128, 128>}, {transform_indices = @transform_2, window_bounds = array<i64: 1, 128>}, {transform_indices = @transform_3, window_bounds = array<i64: 16, 128>}]} {
    %c0_i32 = arith.constant 0 : i32
    %0 = arith.cmpi eq, %arg2, %c0_i32 : i32
    %1 = arith.extui %0 : i1 to i32
    %c0_i32_0 = arith.constant 0 : i32
    %2 = arith.cmpi ne, %1, %c0_i32_0 : i32
    scf.if %2 {
      %cst_10 = arith.constant 0.000000e+00 : f32
      %12 = vector.broadcast %cst_10 : f32 to vector<16x128xf32>
      %c0_11 = arith.constant 0 : index
      %c0_12 = arith.constant 0 : index
      %13 = vector.load %arg7[%c0_11, %c0_12] : memref<16x128xf32, #tpu.memory_space<vmem>>, vector<16x128xf32>
      tpu.vector_store %arg7[%c0_11, %c0_12], %12 {strides = array<i32>} : memref<16x128xf32, #tpu.memory_space<vmem>>, vector<16x128xf32>,
    } else {
    }
    %c0 = arith.constant 0 : index
    %c0_1 = arith.constant 0 : index
    %3 = vector.load %arg7[%c0, %c0_1] : memref<16x128xf32, #tpu.memory_space<vmem>>, vector<16x128xf32>
    %c0_2 = arith.constant 0 : index
    %c0_3 = arith.constant 0 : index
    %4 = vector.load %arg3[%c0_2, %c0_3] : memref<16x128xbf16, #tpu.memory_space<vmem>>, vector<16x128xbf16>
    %c0_4 = arith.constant 0 : index
    %c0_5 = arith.constant 0 : index
    %5 = vector.load %arg4[%c0_4, %c0_5] : memref<128x128xbf16, #tpu.memory_space<vmem>>, vector<128x128xbf16>
    %cst = arith.constant dense<0.000000e+00> : vector<16x128xf32>
    %6 = tpu.matmul %4, %5, %cst {dimension_numbers = #tpu.dot_dimension_numbers<[1], [1], [0], [0], [0, 0, 1, 0], [], []>} : vector<16x128xbf16>, vector<128x128xbf16>, vector<16x128xf32> -> vector<16x128xf32>
    %7 = arith.addf %3, %6 : vector<16x128xf32>
    %c0_6 = arith.constant 0 : index
    %c0_7 = arith.constant 0 : index
    %8 = vector.load %arg7[%c0_6, %c0_7] : memref<16x128xf32, #tpu.memory_space<vmem>>, vector<16x128xf32>
    tpu.vector_store %arg7[%c0_6, %c0_7], %7 {strides = array<i32>} : memref<16x128xf32, #tpu.memory_space<vmem>>, vector<16x128xf32>,
    %c0_i32_8 = arith.constant 0 : i32
    %9 = arith.cmpi eq, %arg2, %c0_i32_8 : i32
    %10 = arith.extui %9 : i1 to i32
    %c0_i32_9 = arith.constant 0 : i32
    %11 = arith.cmpi ne, %10, %c0_i32_9 : i32
    scf.if %11 {
      %c0_10 = arith.constant 0 : index
      %c0_11 = arith.constant 0 : index
      %12 = vector.load %arg7[%c0_10, %c0_11] : memref<16x128xf32, #tpu.memory_space<vmem>>, vector<16x128xf32>
      %c0_12 = arith.constant 0 : index
      %c0_13 = arith.constant 0 : index
      %13 = vector.load %arg5[%c0_12, %c0_13] : memref<1x128xf32, #tpu.memory_space<vmem>>, vector<1x128xf32>
      %14 = vector.broadcast %13 : vector<1x128xf32> to vector<16x128xf32>
      %15 = arith.addf %12, %14 : vector<16x128xf32>
      %c0_14 = arith.constant 0 : index
      %c0_15 = arith.constant 0 : index
      %16 = vector.load %arg6[%c0_14, %c0_15] : memref<16x128xf32, #tpu.memory_space<vmem>>, vector<16x128xf32>
      tpu.vector_store %arg6[%c0_14, %c0_15], %15 {strides = array<i32>} : memref<16x128xf32, #tpu.memory_space<vmem>>, vector<16x128xf32>,
    } else {
    }
    return
  }
  func.func @transform_0(%arg0: i32, %arg1: i32, %arg2: i32) -> (i32, i32) {
    %c0_i32 = arith.constant 0 : i32
    return %arg0, %arg2 : i32, i32
  }
  func.func @transform_1(%arg0: i32, %arg1: i32, %arg2: i32) -> (i32, i32) {
    %c0_i32 = arith.constant 0 : i32
    return %arg1, %arg2 : i32, i32
  }
  func.func @transform_2(%arg0: i32, %arg1: i32, %arg2: i32) -> (i32, i32) {
    %c0_i32 = arith.constant 0 : i32
    %c0_i32_0 = arith.constant 0 : i32
    return %c0_i32, %arg1 : i32, i32
  }
  func.func @transform_3(%arg0: i32, %arg1: i32, %arg2: i32) -> (i32, i32) {
    %c0_i32 = arith.constant 0 : i32
    return %arg0, %arg1 : i32, i32
  }
}

</mosaic_0001>

<llo_original>
// kernel: mlp_projector.1
$region0: #{mlp_projector.1}
  #allocation0 [shape = 'u32[]', space=smem, size = 0x4, offset = 0x4, fixed_abs, tag = 'smem constant byte address 0x4 - core index']
  #allocation1 [shape = 'u32[72,128]{1,0:T(1,128)}', space=vmem, size = 0x9000, scoped, tag = 'internal scratch']
  #allocation2 [shape = 'f32[16,128]{1,0:T(8,128)}', space=vmem, size = 0x2000, scoped, tag = 'scratch operand']
  %s0 = inlined_call_operand.vmem [shape: bf16[16,128], index: 0, kind: input, shape index: {}]
  %s1 = inlined_call_operand.vmem [shape: bf16[128,128], index: 1, kind: input, shape index: {}]
  %s2 = inlined_call_operand.vmem [shape: f32[1,128], index: 2, kind: input, shape index: {}]
  %s3 = inlined_call_operand.hbm [shape: f32[16,128], index: 3, kind: output, shape index: {}]
  %s4 = sld [smem:[#allocation0]]
  $region30: #{mlp_projector.1} parent=0
    _
  %s6 = ssub.s32 1, %s4
  %s7 = scalar_select 0, %s6, %s4
  $region1: #{mlp_projector.1} parent=0
    #allocation3 [shape = 'u8[8192]{0}', space=vmem, size = 0x2000, scoped, tag = 'output window, operand 0, single buffered']
    #allocation4 [shape = 's32[1]{0}', space=sflag, size = 0x4, scoped, tag = 'scoped memory for mlp_projector.1']
    %8 = vsyncpa [#allocation4], 0
    // Predicated region
    $region2: #{mlp_projector.1} parent=1 // pred_check
      _
    $region3: #{mlp_projector.1} parent=1 // pred_check_branch
      %10 = sbr.rel (0) target = $region5
    $region4: #{mlp_projector.1} parent=1 // pred_region
      _
    $region5: #{mlp_projector.1} parent=1 // pred_fallthru
      _
    // Predicated region
    $region6: #{mlp_projector.1} parent=1 // pred_check
      _
    $region7: #{mlp_projector.1} parent=1 // pred_check_branch
      %12 = sbr.rel (0) target = $region9
    $region8: #{mlp_projector.1} parent=1 // pred_region
      _
    $region9: #{mlp_projector.1} parent=1 // pred_fallthru
      _
    // Predicated region
    $region10: #{mlp_projector.1} parent=1 // pred_check
      _
    $region11: #{mlp_projector.1} parent=1 // pred_check_branch
      %14 = sbr.rel (0) target = $region13
    $region12: #{mlp_projector.1} parent=1 // pred_region
      _
    $region13: #{mlp_projector.1} parent=1 // pred_fallthru
      _
    %p15 = scmp.eq.s32.totalorder 0, 0
    // Predicated region
    $region14: #{mlp_projector.1} parent=1 // pred_check
      %p16 = pneg %p15
    $region15: #{mlp_projector.1} parent=1 // pred_check_branch
      %18 = sbr.rel (%p16) target = $region17
    $region16: #{mlp_projector.1} parent=1 // pred_region
      %19 = vst [vmem:[#allocation2] sm:$0xff] 0.0
      %20 = vst [vmem:[#allocation2 + $0x8] sm:$0xff] 0.0
    $region17: #{mlp_projector.1} parent=1 // pred_fallthru
      _
    %v21 = vld [vmem:[#allocation2] sm:$0xff]
    %v22 = vld [vmem:[#allocation2 + $0x8] sm:$0xff]
    %v23 = vld [vmem:[%s0] sm:$0xf]
    %v24 = vld [vmem:[%s0 + $0x4] sm:$0xf]
    %v25 = vld [vmem:[%s1] sm:$0xf]
    %v26 = vld [vmem:[%s1 + $0x4] sm:$0xf]
    %v27 = vld [vmem:[%s1 + $0x8] sm:$0xf]
    %v28 = vld [vmem:[%s1 + $0xc] sm:$0xf]
    %v29 = vld [vmem:[%s1 + $0x10] sm:$0xf]
    %v30 = vld [vmem:[%s1 + $0x14] sm:$0xf]
    %v31 = vld [vmem:[%s1 + $0x18] sm:$0xf]
    %v32 = vld [vmem:[%s1 + $0x1c] sm:$0xf]
    %v33 = vld [vmem:[%s1 + $0x20] sm:$0xf]
    %v34 = vld [vmem:[%s1 + $0x24] sm:$0xf]
    %v35 = vld [vmem:[%s1 + $0x28] sm:$0xf]
    %v36 = vld [vmem:[%s1 + $0x2c] sm:$0xf]
    %v37 = vld [vmem:[%s1 + $0x30] sm:$0xf]
    %v38 = vld [vmem:[%s1 + $0x34] sm:$0xf]
    %v39 = vld [vmem:[%s1 + $0x38] sm:$0xf]
    %v40 = vld [vmem:[%s1 + $0x3c] sm:$0xf]
    %v43 = vunpack.c.l.b16 %v23
    %v44 = vunpack.c.l.b16 %v24
    %v45 = vpack.c.b16 %v44, %v43
    %v63 = vunpack.c.l.b16 %v25
    %v64 = vunpack.c.l.b16 %v26
    %v65 = vunpack.c.l.b16 %v27
    %v66 = vunpack.c.l.b16 %v28
    %v67 = vunpack.c.l.b16 %v29
    %v68 = vunpack.c.l.b16 %v30
    %v69 = vunpack.c.l.b16 %v31
    %v70 = vunpack.c.l.b16 %v32
    %v71 = vunpack.c.l.b16 %v33
    %v72 = vunpack.c.l.b16 %v34
    %v73 = vunpack.c.l.b16 %v35
    %v74 = vunpack.c.l.b16 %v36
    %v75 = vunpack.c.l.b16 %v37
    %v76 = vunpack.c.l.b16 %v38
    %v77 = vunpack.c.l.b16 %v39
    %v78 = vunpack.c.l.b16 %v40
    %v79 = vpack.c.b16 %v64, %v63
    %v80 = vpack.c.b16 %v66, %v65
    %v81 = vpack.c.b16 %v68, %v67
    %v82 = vpack.c.b16 %v70, %v69
    %v83 = vpack.c.b16 %v72, %v71
    %v84 = vpack.c.b16 %v74, %v73
    %v85 = vpack.c.b16 %v76, %v75
    %v86 = vpack.c.b16 %v78, %v77
    %95 = vmatpush.bf16.xpose.msra.mxu0 %v86
    %96 = vmatpush.bf16.xpose.msra.mxu0 %v85
    %97 = vmatpush.bf16.xpose.msra.mxu0 %v84
    %98 = vmatpush.bf16.xpose.msra.mxu0 %v83
    %99 = vmatpush.bf16.xpose.msra.mxu0 %v82
    %100 = vmatpush.bf16.xpose.msra.mxu0 %v81
    %101 = vmatpush.bf16.xpose.msra.mxu0 %v80
    %102 = vmatpush.bf16.xpose.msra.mxu0 %v79
    %103 = vmatmul.bf16.gmra.mxu0 %v45
    %v104 = vpop.f32.mrf.mxu0
    %v105 = vadd.f32 0.0, %v104
    %v106 = vpop.f32.mrf.mxu0
    %v107 = vadd.f32 0.0, %v106
    %108 = vdwg.mxu0
    %v109 = vadd.f32 %v21, %v105
    %v110 = vadd.f32 %v22, %v107
    %111 = vst [vmem:[#allocation2] sm:$0xff] %v109
    %112 = vst [vmem:[#allocation2 + $0x8] sm:$0xff] %v110
    // Predicated region
    $region18: #{mlp_projector.1} parent=1 // pred_check
      %p113 = pneg %p15
    $region19: #{mlp_projector.1} parent=1 // pred_check_branch
      %115 = sbr.rel (%p113) target = $region21
    $region20: #{mlp_projector.1} parent=1 // pred_region
      %v116 = vld [vmem:[#allocation2] sm:$0xff]
      %v117 = vld [vmem:[#allocation2 + $0x8] sm:$0xff]
      %v118 = vld [vmem:[%s2] sm:$0x1]
      %v120 = vperm.slane %v118, 0
      %v122 = vadd.f32 %v116, %v120
      %v123 = vadd.f32 %v117, %v120
      %124 = vst [vmem:[#allocation3] sm:$0xff] %v122
      %125 = vst [vmem:[#allocation3 + $0x8] sm:$0xff] %v123
    $region21: #{mlp_projector.1} parent=1 // pred_fallthru
      _
    // Predicated region
    $region22: #{mlp_projector.1} parent=1 // pred_check
      _
    $region23: #{mlp_projector.1} parent=1 // pred_check_branch
      %127 = sbr.rel (0) target = $region25
    $region24: #{mlp_projector.1} parent=1 // pred_region
      %129 = vsyncadd [#allocation4], 0
      %s130 = sshll.u32 [#allocation3], 4
      %s131 = int_to_ptr.vmem [resolvable:$true] %s130
      %s132 = sshll.u32 %s3, 4
      %s133 = int_to_ptr.hbm [resolvable:$true] %s132
      %138 = dma.vmem_to_hbm [thread:$0]  %s131, 256, %s133, [#allocation4], 128, 128, 8
    $region25: #{mlp_projector.1} parent=1 // pred_fallthru
      _
    // Predicated region
    $region26: #{mlp_projector.1} parent=1 // pred_check
      _
    $region27: #{mlp_projector.1} parent=1 // pred_check_branch
      %140 = sbr.rel (0) target = $region29
    $region28: #{mlp_projector.1} parent=1 // pred_region
      %142 = dma.done [#allocation4], 256
    $region29: #{mlp_projector.1} parent=1 // pred_fallthru
      _
    %143 = vsyncpa [#allocation4], 1

</llo_original>
